<compile_context>
chip_gen: v7x
topology: tpu7x:2x2x1
jax: 0.10.0
libtpu: 0.0.40
codegen_flags: <defaults>
</compile_context>

<pallas_src>
import jax
import jax.numpy as jnp
from jax.experimental import pallas as pl
from jax.experimental.pallas import tpu as pltpu

_LANE = 128        # vreg lane width -> lane-dense feature dims
_SUBLANE = 8       # f32 sublane count -> batch-tile granularity
_TILE_B = 512      # max rows per grid step (well under VMEM on v5e/v6e/v7x)
_NEG = -1e30       # final-layer bias padding so padded logits exp() to 0


def _round_up(n, m):
    return ((n + m - 1) // m) * m


def _mlp_kernel(x_ref,
                w1_ref, b1_ref,
                w2_ref, b2_ref,
                w3_ref, b3_ref,
                w4_ref, b4_ref,
                o_ref):
    # x / weights arrive in bf16; all MXU accumulation in f32.
    h = jnp.dot(x_ref[...], w1_ref[...], preferred_element_type=jnp.float32) + b1_ref[...]
    h = jnp.maximum(h, 0.0).astype(jnp.bfloat16)
    h = jnp.dot(h, w2_ref[...], preferred_element_type=jnp.float32) + b2_ref[...]
    h = jnp.maximum(h, 0.0).astype(jnp.bfloat16)
    h = jnp.dot(h, w3_ref[...], preferred_element_type=jnp.float32) + b3_ref[...]
    h = jnp.maximum(h, 0.0).astype(jnp.bfloat16)
    logits = jnp.dot(h, w4_ref[...], preferred_element_type=jnp.float32) + b4_ref[...]

    # Numerically stable softmax over the (lane-padded) feature axis.
    # Padded lanes carry a -1e30 bias, so exp(logit - m) == 0 there.
    m = jnp.max(logits, axis=-1, keepdims=True)
    e = jnp.exp(logits - m)
    denom = jnp.sum(e, axis=-1, keepdims=True)
    o_ref[...] = (e * pl.reciprocal(denom, approx=True)).astype(o_ref.dtype)


@jax.jit
def mlp_forward(x, params):
    """x: (B, hidden[0]) f32. params: list of (W_t, b) with W_t (in, out), b (1, out)."""
    (w1, b1), (w2, b2), (w3, b3), (w4, b4) = params
    B, d0 = x.shape
    d1, d2, d3, d4 = w1.shape[1], w2.shape[1], w3.shape[1], w4.shape[1]

    # Pad feature dims up to 128 lanes (lane-dense vregs / MXU tiles, unmasked stores).
    p0, p1, p2, p3, p4 = (_round_up(d, _LANE) for d in (d0, d1, d2, d3, d4))

    # Batch tiling: multiple of the f32 sublane count, capped at _TILE_B.
    tb = min(_TILE_B, _round_up(B, _SUBLANE))
    B_pad = _round_up(B, tb)
    grid = (B_pad // tb,)

    # Zero-padding is semantically neutral for the hidden layers (ReLU(0) = 0,
    # zero weight rows/cols contribute nothing). The final bias pads with -1e30
    # so the extra output lanes drop out of the softmax.
    xp = jnp.pad(x, ((0, B_pad - B), (0, p0 - d0))).astype(jnp.bfloat16)
    w1p = jnp.pad(w1, ((0, p0 - d0), (0, p1 - d1))).astype(jnp.bfloat16)
    b1p = jnp.pad(b1, ((0, 0), (0, p1 - d1))).astype(jnp.float32)
    w2p = jnp.pad(w2, ((0, p1 - d1), (0, p2 - d2))).astype(jnp.bfloat16)
    b2p = jnp.pad(b2, ((0, 0), (0, p2 - d2))).astype(jnp.float32)
    w3p = jnp.pad(w3, ((0, p2 - d2), (0, p3 - d3))).astype(jnp.bfloat16)
    b3p = jnp.pad(b3, ((0, 0), (0, p3 - d3))).astype(jnp.float32)
    w4p = jnp.pad(w4, ((0, p3 - d3), (0, p4 - d4))).astype(jnp.bfloat16)
    b4p = jnp.pad(b4.astype(jnp.float32), ((0, 0), (0, p4 - d4)),
                  constant_values=_NEG)

    vmem = pltpu.MemorySpace.VMEM

    def tiled(shape):
        # Per-grid-step batch tile.
        return pl.BlockSpec(shape, lambda i: (i, 0), memory_space=vmem)

    def resident(shape):
        # Same block at every grid step -> weights/biases stay VMEM-resident.
        return pl.BlockSpec(shape, lambda i: (0, 0), memory_space=vmem)

    flops = 2 * B_pad * (p0 * p1 + p1 * p2 + p2 * p3 + p3 * p4)
    transcendentals = B_pad * p4
    weight_bytes = sum(int(a.size) * a.dtype.itemsize
                       for a in (w1p, b1p, w2p, b2p, w3p, b3p, w4p, b4p))
    bytes_accessed = int(xp.size) * 2 + B_pad * p4 * 4 + weight_bytes

    out = pl.pallas_call(
        _mlp_kernel,
        out_shape=jax.ShapeDtypeStruct((B_pad, p4), jnp.float32),
        grid=grid,
        in_specs=[
            tiled((tb, p0)),
            resident((p0, p1)), resident((1, p1)),
            resident((p1, p2)), resident((1, p2)),
            resident((p2, p3)), resident((1, p3)),
            resident((p3, p4)), resident((1, p4)),
        ],
        out_specs=tiled((tb, p4)),
        compiler_params=pltpu.CompilerParams(
            dimension_semantics=("parallel",)),
        cost_estimate=pl.CostEstimate(
            flops=flops,
            transcendentals=transcendentals,
            bytes_accessed=bytes_accessed),
    )(xp, w1p, b1p, w2p, b2p, w3p, b3p, w4p, b4p)

    return out[:B, :d4]


def init_params(key, hidden):
    """Deterministic init mimicking nn.Linear's U(-1/sqrt(fan_in), 1/sqrt(fan_in))."""
    params = []
    for i in range(4):
        fan_in, fan_out = hidden[i], hidden[i + 1]
        key, kw, kb = jax.random.split(key, 3)
        bound = 1.0 / jnp.sqrt(jnp.float32(fan_in))
        # PyTorch stores W as (out, in); we keep it transposed (in, out) for the kernel.
        w_t = jax.random.uniform(kw, (fan_in, fan_out), jnp.float32, -bound, bound)
        b = jax.random.uniform(kb, (1, fan_out), jnp.float32, -bound, bound)
        params.append((w_t, b))
    return params


def mlp_reference(x, params):
    """Pure-JAX f32 reference matching the PyTorch module's forward."""
    h = x
    for i, (w, b) in enumerate(params):
        h = h @ w + b
        if i < len(params) - 1:
            h = jnp.maximum(h, 0.0)
    return jax.nn.softmax(h, axis=-1)   # nn.Softmax() -> dim=1 for 2-D input


if __name__ == "__main__":
    hidden = [32, 64, 64, 32, 16]   # hidden[0]..hidden[4] as in MLP(hidden)
    batch = 8

    key = jax.random.PRNGKey(0)
    key, kx = jax.random.split(key)
    x = jax.random.normal(kx, (batch, hidden[0]), jnp.float32)
    params = init_params(key, hidden)

    out = jax.block_until_ready(mlp_forward(x, params))
    ref = mlp_reference(x, params)

    assert out.shape == (batch, hidden[4])
    # softmax rows sum to ~1 (approx reciprocal + bf16 operands -> small drift)
    assert bool(jnp.all(jnp.abs(jnp.sum(out, axis=-1) - 1.0) < 1e-2))
    assert bool(jnp.allclose(out, ref, atol=2e-2, rtol=2e-2))

    print("KERNEL_OK")
</pallas_src>

<mosaic_0001>
module attributes {stable_mosaic.version = 11 : i64} {
  func.func @_mlp_kernel(%arg0: i32, %arg1: memref<8x128xbf16, #tpu.memory_space<vmem>>, %arg2: memref<128x128xbf16, #tpu.memory_space<vmem>>, %arg3: memref<1x128xf32, #tpu.memory_space<vmem>>, %arg4: memref<128x128xbf16, #tpu.memory_space<vmem>>, %arg5: memref<1x128xf32, #tpu.memory_space<vmem>>, %arg6: memref<128x128xbf16, #tpu.memory_space<vmem>>, %arg7: memref<1x128xf32, #tpu.memory_space<vmem>>, %arg8: memref<128x128xbf16, #tpu.memory_space<vmem>>, %arg9: memref<1x128xf32, #tpu.memory_space<vmem>>, %arg10: memref<8x128xf32, #tpu.memory_space<vmem>>) attributes {dimension_semantics = [#tpu.dimension_semantics<parallel>], iteration_bounds = array<i64: 1>, scalar_prefetch = 0 : i64, scratch_operands = 0 : i64, tpu.core_type = #tpu.core_type<tc>, window_params = [{transform_indices = @transform_0, window_bounds = array<i64: 8, 128>}, {pipeline_mode = #tpu.pipeline_mode<synchronous>, transform_indices = @transform_1, window_bounds = array<i64: 128, 128>}, {pipeline_mode = #tpu.pipeline_mode<synchronous>, transform_indices = @transform_2, window_bounds = array<i64: 1, 128>}, {pipeline_mode = #tpu.pipeline_mode<synchronous>, transform_indices = @transform_3, window_bounds = array<i64: 128, 128>}, {pipeline_mode = #tpu.pipeline_mode<synchronous>, transform_indices = @transform_4, window_bounds = array<i64: 1, 128>}, {pipeline_mode = #tpu.pipeline_mode<synchronous>, transform_indices = @transform_5, window_bounds = array<i64: 128, 128>}, {pipeline_mode = #tpu.pipeline_mode<synchronous>, transform_indices = @transform_6, window_bounds = array<i64: 1, 128>}, {pipeline_mode = #tpu.pipeline_mode<synchronous>, transform_indices = @transform_7, window_bounds = array<i64: 128, 128>}, {pipeline_mode = #tpu.pipeline_mode<synchronous>, transform_indices = @transform_8, window_bounds = array<i64: 1, 128>}, {transform_indices = @transform_9, window_bounds = array<i64: 8, 128>}]} {
    %c0 = arith.constant 0 : index
    %c0_0 = arith.constant 0 : index
    %0 = vector.load %arg1[%c0, %c0_0] : memref<8x128xbf16, #tpu.memory_space<vmem>>, vector<8x128xbf16>
    %c0_1 = arith.constant 0 : index
    %c0_2 = arith.constant 0 : index
    %1 = vector.load %arg2[%c0_1, %c0_2] : memref<128x128xbf16, #tpu.memory_space<vmem>>, vector<128x128xbf16>
    %cst = arith.constant dense<0.000000e+00> : vector<8x128xf32>
    %2 = tpu.matmul %0, %1, %cst {dimension_numbers = #tpu.dot_dimension_numbers<[1], [0], [0], [1], [0, 0, 1, 1], [], []>} : vector<8x128xbf16>, vector<128x128xbf16>, vector<8x128xf32> -> vector<8x128xf32>
    %c0_3 = arith.constant 0 : index
    %c0_4 = arith.constant 0 : index
    %3 = vector.load %arg3[%c0_3, %c0_4] : memref<1x128xf32, #tpu.memory_space<vmem>>, vector<1x128xf32>
    %4 = vector.broadcast %3 : vector<1x128xf32> to vector<8x128xf32>
    %5 = arith.addf %2, %4 : vector<8x128xf32>
    %cst_5 = arith.constant 0.000000e+00 : f32
    %6 = vector.broadcast %cst_5 : f32 to vector<8x128xf32>
    %7 = arith.maximumf %5, %6 : vector<8x128xf32>
    %8 = arith.truncf %7 : vector<8x128xf32> to vector<8x128xbf16>
    %c0_6 = arith.constant 0 : index
    %c0_7 = arith.constant 0 : index
    %9 = vector.load %arg4[%c0_6, %c0_7] : memref<128x128xbf16, #tpu.memory_space<vmem>>, vector<128x128xbf16>
    %cst_8 = arith.constant dense<0.000000e+00> : vector<8x128xf32>
    %10 = tpu.matmul %8, %9, %cst_8 {dimension_numbers = #tpu.dot_dimension_numbers<[1], [0], [0], [1], [0, 0, 1, 1], [], []>} : vector<8x128xbf16>, vector<128x128xbf16>, vector<8x128xf32> -> vector<8x128xf32>
    %c0_9 = arith.constant 0 : index
    %c0_10 = arith.constant 0 : index
    %11 = vector.load %arg5[%c0_9, %c0_10] : memref<1x128xf32, #tpu.memory_space<vmem>>, vector<1x128xf32>
    %12 = vector.broadcast %11 : vector<1x128xf32> to vector<8x128xf32>
    %13 = arith.addf %10, %12 : vector<8x128xf32>
    %cst_11 = arith.constant 0.000000e+00 : f32
    %14 = vector.broadcast %cst_11 : f32 to vector<8x128xf32>
    %15 = arith.maximumf %13, %14 : vector<8x128xf32>
    %16 = arith.truncf %15 : vector<8x128xf32> to vector<8x128xbf16>
    %c0_12 = arith.constant 0 : index
    %c0_13 = arith.constant 0 : index
    %17 = vector.load %arg6[%c0_12, %c0_13] : memref<128x128xbf16, #tpu.memory_space<vmem>>, vector<128x128xbf16>
    %cst_14 = arith.constant dense<0.000000e+00> : vector<8x128xf32>
    %18 = tpu.matmul %16, %17, %cst_14 {dimension_numbers = #tpu.dot_dimension_numbers<[1], [0], [0], [1], [0, 0, 1, 1], [], []>} : vector<8x128xbf16>, vector<128x128xbf16>, vector<8x128xf32> -> vector<8x128xf32>
    %c0_15 = arith.constant 0 : index
    %c0_16 = arith.constant 0 : index
    %19 = vector.load %arg7[%c0_15, %c0_16] : memref<1x128xf32, #tpu.memory_space<vmem>>, vector<1x128xf32>
    %20 = vector.broadcast %19 : vector<1x128xf32> to vector<8x128xf32>
    %21 = arith.addf %18, %20 : vector<8x128xf32>
    %cst_17 = arith.constant 0.000000e+00 : f32
    %22 = vector.broadcast %cst_17 : f32 to vector<8x128xf32>
    %23 = arith.maximumf %21, %22 : vector<8x128xf32>
    %24 = arith.truncf %23 : vector<8x128xf32> to vector<8x128xbf16>
    %c0_18 = arith.constant 0 : index
    %c0_19 = arith.constant 0 : index
    %25 = vector.load %arg8[%c0_18, %c0_19] : memref<128x128xbf16, #tpu.memory_space<vmem>>, vector<128x128xbf16>
    %cst_20 = arith.constant dense<0.000000e+00> : vector<8x128xf32>
    %26 = tpu.matmul %24, %25, %cst_20 {dimension_numbers = #tpu.dot_dimension_numbers<[1], [0], [0], [1], [0, 0, 1, 1], [], []>} : vector<8x128xbf16>, vector<128x128xbf16>, vector<8x128xf32> -> vector<8x128xf32>
    %c0_21 = arith.constant 0 : index
    %c0_22 = arith.constant 0 : index
    %27 = vector.load %arg9[%c0_21, %c0_22] : memref<1x128xf32, #tpu.memory_space<vmem>>, vector<1x128xf32>
    %28 = vector.broadcast %27 : vector<1x128xf32> to vector<8x128xf32>
    %29 = arith.addf %26, %28 : vector<8x128xf32>
    %cst_23 = arith.constant dense<0xFF800000> : vector<8xf32>
    %30 = vector.multi_reduction <maximumf>, %29, %cst_23 [1] : vector<8x128xf32> to vector<8xf32>
    %31 = vector.shape_cast %30 : vector<8xf32> to vector<8x1xf32>
    %32 = vector.broadcast %31 : vector<8x1xf32> to vector<8x128xf32>
    %33 = arith.subf %29, %32 : vector<8x128xf32>
    %34 = math.exp %33 : vector<8x128xf32>
    %cst_24 = arith.constant dense<0.000000e+00> : vector<8xf32>
    %35 = vector.multi_reduction <add>, %34, %cst_24 [1] : vector<8x128xf32> to vector<8xf32>
    %36 = vector.shape_cast %35 : vector<8xf32> to vector<8x1xf32>
    %37 = tpu.reciprocal %36 {approx = true} : vector<8x1xf32> -> vector<8x1xf32>
    %38 = vector.broadcast %37 : vector<8x1xf32> to vector<8x128xf32>
    %39 = arith.mulf %34, %38 : vector<8x128xf32>
    %c0_25 = arith.constant 0 : index
    %c0_26 = arith.constant 0 : index
    %40 = vector.load %arg10[%c0_25, %c0_26] : memref<8x128xf32, #tpu.memory_space<vmem>>, vector<8x128xf32>
    tpu.vector_store %arg10[%c0_25, %c0_26], %39 {strides = array<i32>} : memref<8x128xf32, #tpu.memory_space<vmem>>, vector<8x128xf32>,
    return
  }
  func.func @transform_0(%arg0: i32) -> (i32, i32) {
    %c0_i32 = arith.constant 0 : i32
    %c0_i32_0 = arith.constant 0 : i32
    return %arg0, %c0_i32 : i32, i32
  }
  func.func @transform_1(%arg0: i32) -> (i32, i32) {
    %c0_i32 = arith.constant 0 : i32
    %c0_i32_0 = arith.constant 0 : i32
    %c0_i32_1 = arith.constant 0 : i32
    return %c0_i32, %c0_i32_0 : i32, i32
  }
  func.func @transform_2(%arg0: i32) -> (i32, i32) {
    %c0_i32 = arith.constant 0 : i32
    %c0_i32_0 = arith.constant 0 : i32
    %c0_i32_1 = arith.constant 0 : i32
    return %c0_i32, %c0_i32_0 : i32, i32
  }
  func.func @transform_3(%arg0: i32) -> (i32, i32) {
    %c0_i32 = arith.constant 0 : i32
    %c0_i32_0 = arith.constant 0 : i32
    %c0_i32_1 = arith.constant 0 : i32
    return %c0_i32, %c0_i32_0 : i32, i32
  }
  func.func @transform_4(%arg0: i32) -> (i32, i32) {
    %c0_i32 = arith.constant 0 : i32
    %c0_i32_0 = arith.constant 0 : i32
    %c0_i32_1 = arith.constant 0 : i32
    return %c0_i32, %c0_i32_0 : i32, i32
  }
  func.func @transform_5(%arg0: i32) -> (i32, i32) {
    %c0_i32 = arith.constant 0 : i32
    %c0_i32_0 = arith.constant 0 : i32
    %c0_i32_1 = arith.constant 0 : i32
    return %c0_i32, %c0_i32_0 : i32, i32
  }
  func.func @transform_6(%arg0: i32) -> (i32, i32) {
    %c0_i32 = arith.constant 0 : i32
    %c0_i32_0 = arith.constant 0 : i32
    %c0_i32_1 = arith.constant 0 : i32
    return %c0_i32, %c0_i32_0 : i32, i32
  }
  func.func @transform_7(%arg0: i32) -> (i32, i32) {
    %c0_i32 = arith.constant 0 : i32
    %c0_i32_0 = arith.constant 0 : i32
    %c0_i32_1 = arith.constant 0 : i32
    return %c0_i32, %c0_i32_0 : i32, i32
  }
  func.func @transform_8(%arg0: i32) -> (i32, i32) {
    %c0_i32 = arith.constant 0 : i32
    %c0_i32_0 = arith.constant 0 : i32
    %c0_i32_1 = arith.constant 0 : i32
    return %c0_i32, %c0_i32_0 : i32, i32
  }
  func.func @transform_9(%arg0: i32) -> (i32, i32) {
    %c0_i32 = arith.constant 0 : i32
    %c0_i32_0 = arith.constant 0 : i32
    return %arg0, %c0_i32 : i32, i32
  }
}

</mosaic_0001>

<llo_original>
// kernel: mlp_forward.1
$region0: #{mlp_forward.1}
  #allocation0 [shape = 'u32[]', space=smem, size = 0x4, offset = 0x4, fixed_abs, tag = 'smem constant byte address 0x4 - core index']
  #allocation1 [shape = 'u32[144,128]{1,0:T(1,128)}', space=vmem, size = 0x12000, scoped, tag = 'internal scratch']
  %s0 = inlined_call_operand.vmem [shape: bf16[8,128], index: 0, kind: input, shape index: {}]
  %s1 = inlined_call_operand.vmem [shape: bf16[128,128], index: 1, kind: input, shape index: {}]
  %s2 = inlined_call_operand.vmem [shape: f32[1,128], index: 2, kind: input, shape index: {}]
  %s3 = inlined_call_operand.vmem [shape: bf16[128,128], index: 3, kind: input, shape index: {}]
  %s4 = inlined_call_operand.vmem [shape: f32[1,128], index: 4, kind: input, shape index: {}]
  %s5 = inlined_call_operand.vmem [shape: bf16[128,128], index: 5, kind: input, shape index: {}]
  %s6 = inlined_call_operand.vmem [shape: f32[1,128], index: 6, kind: input, shape index: {}]
  %s7 = inlined_call_operand.vmem [shape: bf16[128,128], index: 7, kind: input, shape index: {}]
  %s8 = inlined_call_operand.vmem [shape: f32[1,128], index: 8, kind: input, shape index: {}]
  %s9 = inlined_call_operand.hbm [shape: f32[8,128], index: 9, kind: output, shape index: {}]
  %s10 = sld [smem:[#allocation0]]
  $region46: #{mlp_forward.1} parent=0
    _
  %s12 = ssub.s32 1, %s10
  %s13 = scalar_select 0, %s12, %s10
  $region1: #{mlp_forward.1} parent=0
    #allocation2 [shape = 'u8[4096]{0}', space=vmem, size = 0x1000, scoped, tag = 'output window, operand 0, single buffered']
    #allocation3 [shape = 's32[1]{0}', space=sflag, size = 0x4, scoped, tag = 'scoped memory for mlp_forward.1']
    %14 = vsyncpa [#allocation3], 0
    // Predicated region
    $region2: #{mlp_forward.1} parent=1 // pred_check
      _
    $region3: #{mlp_forward.1} parent=1 // pred_check_branch
      %16 = sbr.rel (0) target = $region5
    $region4: #{mlp_forward.1} parent=1 // pred_region
      _
    $region5: #{mlp_forward.1} parent=1 // pred_fallthru
      _
    // Predicated region
    $region6: #{mlp_forward.1} parent=1 // pred_check
      _
    $region7: #{mlp_forward.1} parent=1 // pred_check_branch
      %18 = sbr.rel (0) target = $region9
    $region8: #{mlp_forward.1} parent=1 // pred_region
      _
    $region9: #{mlp_forward.1} parent=1 // pred_fallthru
      _
    // Predicated region
    $region10: #{mlp_forward.1} parent=1 // pred_check
      _
    $region11: #{mlp_forward.1} parent=1 // pred_check_branch
      %20 = sbr.rel (0) target = $region13
    $region12: #{mlp_forward.1} parent=1 // pred_region
      _
    $region13: #{mlp_forward.1} parent=1 // pred_fallthru
      _
    // Predicated region
    $region14: #{mlp_forward.1} parent=1 // pred_check
      _
    $region15: #{mlp_forward.1} parent=1 // pred_check_branch
      %22 = sbr.rel (0) target = $region17
    $region16: #{mlp_forward.1} parent=1 // pred_region
      _
    $region17: #{mlp_forward.1} parent=1 // pred_fallthru
      _
    // Predicated region
    $region18: #{mlp_forward.1} parent=1 // pred_check
      _
    $region19: #{mlp_forward.1} parent=1 // pred_check_branch
      %24 = sbr.rel (0) target = $region21
    $region20: #{mlp_forward.1} parent=1 // pred_region
      _
    $region21: #{mlp_forward.1} parent=1 // pred_fallthru
      _
    // Predicated region
    $region22: #{mlp_forward.1} parent=1 // pred_check
      _
    $region23: #{mlp_forward.1} parent=1 // pred_check_branch
      %26 = sbr.rel (0) target = $region25
    $region24: #{mlp_forward.1} parent=1 // pred_region
      _
    $region25: #{mlp_forward.1} parent=1 // pred_fallthru
      _
    // Predicated region
    $region26: #{mlp_forward.1} parent=1 // pred_check
      _
    $region27: #{mlp_forward.1} parent=1 // pred_check_branch
      %28 = sbr.rel (0) target = $region29
    $region28: #{mlp_forward.1} parent=1 // pred_region
      _
    $region29: #{mlp_forward.1} parent=1 // pred_fallthru
      _
    // Predicated region
    $region30: #{mlp_forward.1} parent=1 // pred_check
      _
    $region31: #{mlp_forward.1} parent=1 // pred_check_branch
      %30 = sbr.rel (0) target = $region33
    $region32: #{mlp_forward.1} parent=1 // pred_region
      _
    $region33: #{mlp_forward.1} parent=1 // pred_fallthru
      _
    // Predicated region
    $region34: #{mlp_forward.1} parent=1 // pred_check
      _
    $region35: #{mlp_forward.1} parent=1 // pred_check_branch
      %32 = sbr.rel (0) target = $region37
    $region36: #{mlp_forward.1} parent=1 // pred_region
      _
    $region37: #{mlp_forward.1} parent=1 // pred_fallthru
      _
    %v34 = vld [vmem:[%s0] sm:$0xf]
    %v35 = vld [vmem:[%s1] sm:$0xf]
    %v36 = vld [vmem:[%s1 + $0x4] sm:$0xf]
    %v37 = vld [vmem:[%s1 + $0x8] sm:$0xf]
    %v38 = vld [vmem:[%s1 + $0xc] sm:$0xf]
    %v39 = vld [vmem:[%s1 + $0x10] sm:$0xf]
    %v40 = vld [vmem:[%s1 + $0x14] sm:$0xf]
    %v41 = vld [vmem:[%s1 + $0x18] sm:$0xf]
    %v42 = vld [vmem:[%s1 + $0x1c] sm:$0xf]
    %v43 = vld [vmem:[%s1 + $0x20] sm:$0xf]
    %v44 = vld [vmem:[%s1 + $0x24] sm:$0xf]
    %v45 = vld [vmem:[%s1 + $0x28] sm:$0xf]
    %v46 = vld [vmem:[%s1 + $0x2c] sm:$0xf]
    %v47 = vld [vmem:[%s1 + $0x30] sm:$0xf]
    %v48 = vld [vmem:[%s1 + $0x34] sm:$0xf]
    %v49 = vld [vmem:[%s1 + $0x38] sm:$0xf]
    %v50 = vld [vmem:[%s1 + $0x3c] sm:$0xf]
    %v51 = vld [vmem:[%s2] sm:$0x1]
    %v53 = vlaneseq
    %v54 = vshrl.u32 %v53, 7
    %v55 = vsub.s32 0, %v54
    %v56 = vrot.slane %v51, %v55
    %v74 = vunpack.c.l.b16 %v35
    %v75 = vunpack.c.l.b16 %v36
    %v76 = vunpack.c.l.b16 %v37
    %v77 = vunpack.c.l.b16 %v38
    %v78 = vunpack.c.l.b16 %v39
    %v79 = vunpack.c.l.b16 %v40
    %v80 = vunpack.c.l.b16 %v41
    %v81 = vunpack.c.l.b16 %v42
    %v82 = vunpack.c.l.b16 %v43
    %v83 = vunpack.c.l.b16 %v44
    %v84 = vunpack.c.l.b16 %v45
    %v85 = vunpack.c.l.b16 %v46
    %v86 = vunpack.c.l.b16 %v47
    %v87 = vunpack.c.l.b16 %v48
    %v88 = vunpack.c.l.b16 %v49
    %v89 = vunpack.c.l.b16 %v50
    %v90 = vpack.c.b16 %v75, %v74
    %v91 = vpack.c.b16 %v77, %v76
    %v92 = vpack.c.b16 %v79, %v78
    %v93 = vpack.c.b16 %v81, %v80
    %v94 = vpack.c.b16 %v83, %v82
    %v95 = vpack.c.b16 %v85, %v84
    %v96 = vpack.c.b16 %v87, %v86
    %v97 = vpack.c.b16 %v89, %v88
    %106 = vmatprep.subr.bf16.mxu0 0
    %107 = vmatpush1.bf16.msra.mxu0 %v90
    %108 = vmatprep.subr.bf16.mxu0 0
    %109 = vmatpush1.bf16.msra.mxu0 %v91
    %110 = vmatprep.subr.bf16.mxu0 0
    %111 = vmatpush1.bf16.msra.mxu0 %v92
    %112 = vmatprep.subr.bf16.mxu0 0
    %113 = vmatpush1.bf16.msra.mxu0 %v93
    %114 = vmatprep.subr.bf16.mxu0 0
    %115 = vmatpush1.bf16.msra.mxu0 %v94
    %116 = vmatprep.subr.bf16.mxu0 0
    %117 = vmatpush1.bf16.msra.mxu0 %v95
    %118 = vmatprep.subr.bf16.mxu0 0
    %119 = vmatpush1.bf16.msra.mxu0 %v96
    %120 = vmatprep.subr.bf16.mxu0 0
    %121 = vmatpush1.bf16.msra.mxu0 %v97
    %122 = vmatprep.subr.bf16.mxu0 0
    %123 = vmatpush1.bf16.msra.mxu0 0
    %124 = vmatprep.subr.bf16.mxu0 0
    %125 = vmatpush1.bf16.msra.mxu0 0
    %126 = vmatprep.subr.bf16.mxu0 0
    %127 = vmatpush1.bf16.msra.mxu0 0
    %128 = vmatprep.subr.bf16.mxu0 0
    %129 = vmatpush1.bf16.msra.mxu0 0
    %130 = vmatprep.subr.bf16.mxu0 0
    %131 = vmatpush1.bf16.msra.mxu0 0
    %132 = vmatprep.subr.bf16.mxu0 0
    %133 = vmatpush1.bf16.msra.mxu0 0
    %134 = vmatprep.subr.bf16.mxu0 0
    %135 = vmatpush1.bf16.msra.mxu0 0
    %136 = vmatprep.subr.bf16.mxu0 0
    %137 = vmatpush1.bf16.msra.mxu0 0
    %138 = vmatprep.mubr.bf16.mxu0 0
    %139 = vmatmul.mubr.bf16.gmra.mrb[0].mxu0 %v34
    %v140 = vpop.f32.mrb[0].mxu0
    %v141 = vadd.f32 %v56, %v140
    %v142 = vpop.f32.mrb[0].mxu0
    %v143 = vpop.f32.mrb[0].mxu0
    %v144 = vpop.f32.mrb[0].mxu0
    %145 = vdwg.mxu0
    %v146 = vmax.f32 %v141, 0.0
    %v147 = vpack.c.bf16 %v146, %v146
    %v148 = vld [vmem:[%s3] sm:$0xf]
    %v149 = vld [vmem:[%s3 + $0x4] sm:$0xf]
    %v150 = vld [vmem:[%s3 + $0x8] sm:$0xf]
    %v151 = vld [vmem:[%s3 + $0xc] sm:$0xf]
    %v152 = vld [vmem:[%s3 + $0x10] sm:$0xf]
    %v153 = vld [vmem:[%s3 + $0x14] sm:$0xf]
    %v154 = vld [vmem:[%s3 + $0x18] sm:$0xf]
    %v155 = vld [vmem:[%s3 + $0x1c] sm:$0xf]
    %v156 = vld [vmem:[%s3 + $0x20] sm:$0xf]
    %v157 = vld [vmem:[%s3 + $0x24] sm:$0xf]
    %v158 = vld [vmem:[%s3 + $0x28] sm:$0xf]
    %v159 = vld [vmem:[%s3 + $0x2c] sm:$0xf]
    %v160 = vld [vmem:[%s3 + $0x30] sm:$0xf]
    %v161 = vld [vmem:[%s3 + $0x34] sm:$0xf]
    %v162 = vld [vmem:[%s3 + $0x38] sm:$0xf]
    %v163 = vld [vmem:[%s3 + $0x3c] sm:$0xf]
    %v164 = vld [vmem:[%s4] sm:$0x1]
    %v166 = vlaneseq
    %v167 = vshrl.u32 %v166, 7
    %v168 = vsub.s32 0, %v167
    %v169 = vrot.slane %v164, %v168
    %v187 = vunpack.c.l.b16 %v148
    %v188 = vunpack.c.l.b16 %v149
    %v189 = vunpack.c.l.b16 %v150
    %v190 = vunpack.c.l.b16 %v151
    %v191 = vunpack.c.l.b16 %v152
    %v192 = vunpack.c.l.b16 %v153
    %v193 = vunpack.c.l.b16 %v154
    %v194 = vunpack.c.l.b16 %v155
    %v195 = vunpack.c.l.b16 %v156
    %v196 = vunpack.c.l.b16 %v157
    %v197 = vunpack.c.l.b16 %v158
    %v198 = vunpack.c.l.b16 %v159
    %v199 = vunpack.c.l.b16 %v160
    %v200 = vunpack.c.l.b16 %v161
    %v201 = vunpack.c.l.b16 %v162
    %v202 = vunpack.c.l.b16 %v163
    %v203 = vpack.c.b16 %v188, %v187
    %v204 = vpack.c.b16 %v190, %v189
    %v205 = vpack.c.b16 %v192, %v191
    %v206 = vpack.c.b16 %v194, %v193
    %v207 = vpack.c.b16 %v196, %v195
    %v208 = vpack.c.b16 %v198, %v197
    %v209 = vpack.c.b16 %v200, %v199
    %v210 = vpack.c.b16 %v202, %v201
    %219 = vmatprep.subr.bf16.mxu0 0
    %220 = vmatpush1.bf16.msra.mxu0 %v203
    %221 = vmatprep.subr.bf16.mxu0 0
    %222 = vmatpush1.bf16.msra.mxu0 %v204
    %223 = vmatprep.subr.bf16.mxu0 0
    %224 = vmatpush1.bf16.msra.mxu0 %v205
    %225 = vmatprep.subr.bf16.mxu0 0
    %226 = vmatpush1.bf16.msra.mxu0 %v206
    %227 = vmatprep.subr.bf16.mxu0 0
    %228 = vmatpush1.bf16.msra.mxu0 %v207
    %229 = vmatprep.subr.bf16.mxu0 0
    %230 = vmatpush1.bf16.msra.mxu0 %v208
    %231 = vmatprep.subr.bf16.mxu0 0
    %232 = vmatpush1.bf16.msra.mxu0 %v209
    %233 = vmatprep.subr.bf16.mxu0 0
    %234 = vmatpush1.bf16.msra.mxu0 %v210
    %235 = vmatprep.subr.bf16.mxu0 0
    %236 = vmatpush1.bf16.msra.mxu0 0
    %237 = vmatprep.subr.bf16.mxu0 0
    %238 = vmatpush1.bf16.msra.mxu0 0
    %239 = vmatprep.subr.bf16.mxu0 0
    %240 = vmatpush1.bf16.msra.mxu0 0
    %241 = vmatprep.subr.bf16.mxu0 0
    %242 = vmatpush1.bf16.msra.mxu0 0
    %243 = vmatprep.subr.bf16.mxu0 0
    %244 = vmatpush1.bf16.msra.mxu0 0
    %245 = vmatprep.subr.bf16.mxu0 0
    %246 = vmatpush1.bf16.msra.mxu0 0
    %247 = vmatprep.subr.bf16.mxu0 0
    %248 = vmatpush1.bf16.msra.mxu0 0
    %249 = vmatprep.subr.bf16.mxu0 0
    %250 = vmatpush1.bf16.msra.mxu0 0
    %251 = vmatprep.mubr.bf16.mxu0 0
    %252 = vmatmul.mubr.bf16.gmra.mrb[0].mxu0 %v147
    %v253 = vpop.f32.mrb[0].mxu0
    %v254 = vadd.f32 %v169, %v253
    %v255 = vpop.f32.mrb[0].mxu0
    %v256 = vpop.f32.mrb[0].mxu0
    %v257 = vpop.f32.mrb[0].mxu0
    %258 = vdwg.mxu0
    %v259 = vmax.f32 %v254, 0.0
    %v260 = vpack.c.bf16 %v259, %v259
    %v261 = vld [vmem:[%s5] sm:$0xf]
    %v262 = vld [vmem:[%s5 + $0x4] sm:$0xf]
    %v263 = vld [vmem:[%s5 + $0x8] sm:$0xf]
    %v264 = vld [vmem:[%s5 + $0xc] sm:$0xf]
    %v265 = vld [vmem:[%s5 + $0x10] sm:$0xf]
    %v266 = vld [vmem:[%s5 + $0x14] sm:$0xf]
    %v267 = vld [vmem:[%s5 + $0x18] sm:$0xf]
    %v268 = vld [vmem:[%s5 + $0x1c] sm:$0xf]
    %v269 = vld [vmem:[%s5 + $0x20] sm:$0xf]
    %v270 = vld [vmem:[%s5 + $0x24] sm:$0xf]
    %v271 = vld [vmem:[%s5 + $0x28] sm:$0xf]
    %v272 = vld [vmem:[%s5 + $0x2c] sm:$0xf]
    %v273 = vld [vmem:[%s5 + $0x30] sm:$0xf]
    %v274 = vld [vmem:[%s5 + $0x34] sm:$0xf]
    %v275 = vld [vmem:[%s5 + $0x38] sm:$0xf]
    %v276 = vld [vmem:[%s5 + $0x3c] sm:$0xf]
    %v277 = vld [vmem:[%s6] sm:$0x1]
    %v279 = vlaneseq
    %v280 = vshrl.u32 %v279, 7
    %v281 = vsub.s32 0, %v280
    %v282 = vrot.slane %v277, %v281
    %v300 = vunpack.c.l.b16 %v261
    %v301 = vunpack.c.l.b16 %v262
    %v302 = vunpack.c.l.b16 %v263
    %v303 = vunpack.c.l.b16 %v264
    %v304 = vunpack.c.l.b16 %v265
    %v305 = vunpack.c.l.b16 %v266
    %v306 = vunpack.c.l.b16 %v267
    %v307 = vunpack.c.l.b16 %v268
    %v308 = vunpack.c.l.b16 %v269
    %v309 = vunpack.c.l.b16 %v270
    %v310 = vunpack.c.l.b16 %v271
    %v311 = vunpack.c.l.b16 %v272
    %v312 = vunpack.c.l.b16 %v273
    %v313 = vunpack.c.l.b16 %v274
    %v314 = vunpack.c.l.b16 %v275
    %v315 = vunpack.c.l.b16 %v276
    %v316 = vpack.c.b16 %v301, %v300
    %v317 = vpack.c.b16 %v303, %v302
    %v318 = vpack.c.b16 %v305, %v304
    %v319 = vpack.c.b16 %v307, %v306
    %v320 = vpack.c.b16 %v309, %v308
    %v321 = vpack.c.b16 %v311, %v310
    %v322 = vpack.c.b16 %v313, %v312
    %v323 = vpack.c.b16 %v315, %v314
    %332 = vmatprep.subr.bf16.mxu0 0
    %333 = vmatpush1.bf16.msra.mxu0 %v316
    %334 = vmatprep.subr.bf16.mxu0 0
    %335 = vmatpush1.bf16.msra.mxu0 %v317
    %336 = vmatprep.subr.bf16.mxu0 0
    %337 = vmatpush1.bf16.msra.mxu0 %v318
    %338 = vmatprep.subr.bf16.mxu0 0
    %339 = vmatpush1.bf16.msra.mxu0 %v319
    %340 = vmatprep.subr.bf16.mxu0 0
    %341 = vmatpush1.bf16.msra.mxu0 %v320
    %342 = vmatprep.subr.bf16.mxu0 0
    %343 = vmatpush1.bf16.msra.mxu0 %v321
    %344 = vmatprep.subr.bf16.mxu0 0
    %345 = vmatpush1.bf16.msra.mxu0 %v322
    %346 = vmatprep.subr.bf16.mxu0 0
    %347 = vmatpush1.bf16.msra.mxu0 %v323
    %348 = vmatprep.subr.bf16.mxu0 0
    %349 = vmatpush1.bf16.msra.mxu0 0
    %350 = vmatprep.subr.bf16.mxu0 0
    %351 = vmatpush1.bf16.msra.mxu0 0
    %352 = vmatprep.subr.bf16.mxu0 0
    %353 = vmatpush1.bf16.msra.mxu0 0
    %354 = vmatprep.subr.bf16.mxu0 0
    %355 = vmatpush1.bf16.msra.mxu0 0
    %356 = vmatprep.subr.bf16.mxu0 0
    %357 = vmatpush1.bf16.msra.mxu0 0
    %358 = vmatprep.subr.bf16.mxu0 0
    %359 = vmatpush1.bf16.msra.mxu0 0
    %360 = vmatprep.subr.bf16.mxu0 0
    %361 = vmatpush1.bf16.msra.mxu0 0
    %362 = vmatprep.subr.bf16.mxu0 0
    %363 = vmatpush1.bf16.msra.mxu0 0
    %364 = vmatprep.mubr.bf16.mxu0 0
    %365 = vmatmul.mubr.bf16.gmra.mrb[0].mxu0 %v260
    %v366 = vpop.f32.mrb[0].mxu0
    %v367 = vadd.f32 %v282, %v366
    %v368 = vpop.f32.mrb[0].mxu0
    %v369 = vpop.f32.mrb[0].mxu0
    %v370 = vpop.f32.mrb[0].mxu0
    %371 = vdwg.mxu0
    %v372 = vmax.f32 %v367, 0.0
    %v373 = vpack.c.bf16 %v372, %v372
    %v374 = vld [vmem:[%s7] sm:$0xf]
    %v375 = vld [vmem:[%s7 + $0x4] sm:$0xf]
    %v376 = vld [vmem:[%s7 + $0x8] sm:$0xf]
    %v377 = vld [vmem:[%s7 + $0xc] sm:$0xf]
    %v378 = vld [vmem:[%s7 + $0x10] sm:$0xf]
    %v379 = vld [vmem:[%s7 + $0x14] sm:$0xf]
    %v380 = vld [vmem:[%s7 + $0x18] sm:$0xf]
    %v381 = vld [vmem:[%s7 + $0x1c] sm:$0xf]
    %v382 = vld [vmem:[%s7 + $0x20] sm:$0xf]
    %v383 = vld [vmem:[%s7 + $0x24] sm:$0xf]
    %v384 = vld [vmem:[%s7 + $0x28] sm:$0xf]
    %v385 = vld [vmem:[%s7 + $0x2c] sm:$0xf]
    %v386 = vld [vmem:[%s7 + $0x30] sm:$0xf]
    %v387 = vld [vmem:[%s7 + $0x34] sm:$0xf]
    %v388 = vld [vmem:[%s7 + $0x38] sm:$0xf]
    %v389 = vld [vmem:[%s7 + $0x3c] sm:$0xf]
    %v390 = vld [vmem:[%s8] sm:$0x1]
    %v392 = vlaneseq
    %v393 = vshrl.u32 %v392, 7
    %v394 = vsub.s32 0, %v393
    %v395 = vrot.slane %v390, %v394
    %v413 = vunpack.c.l.b16 %v374
    %v414 = vunpack.c.l.b16 %v375
    %v415 = vunpack.c.l.b16 %v376
    %v416 = vunpack.c.l.b16 %v377
    %v417 = vunpack.c.l.b16 %v378
    %v418 = vunpack.c.l.b16 %v379
    %v419 = vunpack.c.l.b16 %v380
    %v420 = vunpack.c.l.b16 %v381
    %v421 = vunpack.c.l.b16 %v382
    %v422 = vunpack.c.l.b16 %v383
    %v423 = vunpack.c.l.b16 %v384
    %v424 = vunpack.c.l.b16 %v385
    %v425 = vunpack.c.l.b16 %v386
    %v426 = vunpack.c.l.b16 %v387
    %v427 = vunpack.c.l.b16 %v388
    %v428 = vunpack.c.l.b16 %v389
    %v429 = vpack.c.b16 %v414, %v413
    %v430 = vpack.c.b16 %v416, %v415
    %v431 = vpack.c.b16 %v418, %v417
    %v432 = vpack.c.b16 %v420, %v419
    %v433 = vpack.c.b16 %v422, %v421
    %v434 = vpack.c.b16 %v424, %v423
    %v435 = vpack.c.b16 %v426, %v425
    %v436 = vpack.c.b16 %v428, %v427
    %445 = vmatprep.subr.bf16.mxu0 0
    %446 = vmatpush1.bf16.msra.mxu0 %v429
    %447 = vmatprep.subr.bf16.mxu0 0
    %448 = vmatpush1.bf16.msra.mxu0 %v430
    %449 = vmatprep.subr.bf16.mxu0 0
    %450 = vmatpush1.bf16.msra.mxu0 %v431
    %451 = vmatprep.subr.bf16.mxu0 0
    %452 = vmatpush1.bf16.msra.mxu0 %v432
    %453 = vmatprep.subr.bf16.mxu0 0
    %454 = vmatpush1.bf16.msra.mxu0 %v433
    %455 = vmatprep.subr.bf16.mxu0 0
    %456 = vmatpush1.bf16.msra.mxu0 %v434
    %457 = vmatprep.subr.bf16.mxu0 0
    %458 = vmatpush1.bf16.msra.mxu0 %v435
    %459 = vmatprep.subr.bf16.mxu0 0
    %460 = vmatpush1.bf16.msra.mxu0 %v436
    %461 = vmatprep.subr.bf16.mxu0 0
    %462 = vmatpush1.bf16.msra.mxu0 0
    %463 = vmatprep.subr.bf16.mxu0 0
    %464 = vmatpush1.bf16.msra.mxu0 0
    %465 = vmatprep.subr.bf16.mxu0 0
    %466 = vmatpush1.bf16.msra.mxu0 0
    %467 = vmatprep.subr.bf16.mxu0 0
    %468 = vmatpush1.bf16.msra.mxu0 0
    %469 = vmatprep.subr.bf16.mxu0 0
    %470 = vmatpush1.bf16.msra.mxu0 0
    %471 = vmatprep.subr.bf16.mxu0 0
    %472 = vmatpush1.bf16.msra.mxu0 0
    %473 = vmatprep.subr.bf16.mxu0 0
    %474 = vmatpush1.bf16.msra.mxu0 0
    %475 = vmatprep.subr.bf16.mxu0 0
    %476 = vmatpush1.bf16.msra.mxu0 0
    %477 = vmatprep.mubr.bf16.mxu0 0
    %478 = vmatmul.mubr.bf16.gmra.mrb[0].mxu0 %v373
    %v479 = vpop.f32.mrb[0].mxu0
    %v480 = vadd.f32 %v395, %v479
    %v481 = vpop.f32.mrb[0].mxu0
    %v482 = vpop.f32.mrb[0].mxu0
    %v483 = vpop.f32.mrb[0].mxu0
    %484 = vdwg.mxu0
    %485 = vmax.xlane.f32.xlu0 %v480
    %v486 = vpop.xlane.xlu0 %485
    %v487 = vsub.f32 %v480, %v486
    %v488 = vmul.f32 %v487, 1.442695
    %v489 = vpow.pop %v488
    %490 = vadd.xlane.f32.xlu0 %v489
    %v491 = vpop.xlane.xlu0 %490
    %v492 = vrcp.pop %v491
    %v493 = vmul.f32 %v489, %v492
    %494 = vst [vmem:[#allocation2] sm:$0xff] %v493
    // Predicated region
    $region38: #{mlp_forward.1} parent=1 // pred_check
      _
    $region39: #{mlp_forward.1} parent=1 // pred_check_branch
      %496 = sbr.rel (0) target = $region41
    $region40: #{mlp_forward.1} parent=1 // pred_region
      %s498 = ssub.s32 128, 128
      %499 = vsyncadd [#allocation3], %s498
      %s501 = sshll.u32 [#allocation2], 4
      %s502 = int_to_ptr.vmem [resolvable:$true] %s501
      %504 = dma.vmem_to_hbm [thread:$0]  %s502, 128, %s9, [#allocation3]
    $region41: #{mlp_forward.1} parent=1 // pred_fallthru
      _
    // Predicated region
    $region42: #{mlp_forward.1} parent=1 // pred_check
      _
    $region43: #{mlp_forward.1} parent=1 // pred_check_branch
      %506 = sbr.rel (0) target = $region45
    $region44: #{mlp_forward.1} parent=1 // pred_region
      %507 = dma.done [#allocation3], 128
    $region45: #{mlp_forward.1} parent=1 // pred_fallthru
      _
    %508 = vsyncpa [#allocation3], 1

</llo_original>
